<compile_context>
chip_gen: v7x
topology: tpu7x:2x2x1
jax: 0.10.0
libtpu: 0.0.40
codegen_flags: <defaults>
</compile_context>

<pallas_src>
import functools

import jax
import jax.numpy as jnp
from jax import lax
from jax.experimental import pallas as pl
from jax.experimental.pallas import tpu as pltpu

# Plain Python float: jnp scalar constants captured by the kernel closure are rejected
# by pallas_call ("captures constants"), Python literals are inlined as weak-typed f32.
_BIG = 1e30


def _round_up(v, m):
    return ((v + m - 1) // m) * m


def _triplet_kernel(xr_ref, xc_ref, nhr_ref, nhc_ref, lr_ref, lc_ref, out_ref,
                    eap_ref, ean_ref, *acc_refs, margin, multi_k):
    j = pl.program_id(1)
    k = pl.program_id(2)
    nj = pl.num_programs(1)
    nk = pl.num_programs(2)

    @pl.when((j == 0) & (k == 0))
    def _init():
        # Lane-dense running accumulators: min(e | same class), max(e | diff class).
        eap_ref[...] = jnp.full(eap_ref.shape, _BIG, jnp.float32)
        ean_ref[...] = jnp.full(ean_ref.shape, -_BIG, jnp.float32)

    # Gram tile on the MXU: (TR, D_blk) x (TC, D_blk)^T with f32 accumulation.
    gram = lax.dot_general(xr_ref[...], xc_ref[...], (((1,), (1,)), ((), ())),
                           preferred_element_type=jnp.float32)          # (TR, TC)

    if multi_k:
        acc_ref = acc_refs[0]

        @pl.when(k == 0)
        def _zero():
            acc_ref[...] = jnp.zeros_like(acc_ref)

        acc_ref[...] += gram

    @pl.when(k == nk - 1)
    def _mine():
        g = acc_refs[0][...] if multi_k else gram
        # e = <x_i, x_j> - 0.5|x_i|^2 - 0.5|x_j|^2  (= -dist^2 / 2); two broadcast adds.
        e = g + nhr_ref[...] + nhc_ref[...]                              # (TR, TC) f32
        same = lr_ref[...] == lc_ref[...]                                # (TR, TC) bool
        e_pos = jnp.where(same, e, _BIG)    # hardest positive <-> min e over same class
        e_neg = jnp.where(same, -_BIG, e)   # hardest negative <-> max e over diff class
        eap = eap_ref[...]
        ean = ean_ref[...]
        # Elementwise VPU fold over static 128-lane chunks (no per-tile XLU reduce).
        for c in range(0, e.shape[1], 128):
            eap = jnp.minimum(eap, e_pos[:, c:c + 128])
            ean = jnp.maximum(ean, e_neg[:, c:c + 128])
        eap_ref[...] = eap
        ean_ref[...] = ean

    @pl.when((j == nj - 1) & (k == nk - 1))
    def _finalize():
        # Single cross-lane reduction per anchor tile; d^2 = -2 e; clamp+sqrt+hinge.
        d_ap2 = -2.0 * jnp.min(eap_ref[...], axis=1, keepdims=True)      # (TR, 1)
        d_an2 = -2.0 * jnp.max(ean_ref[...], axis=1, keepdims=True)
        dist_ap = jnp.sqrt(jnp.maximum(d_ap2, 1e-12))
        dist_an = jnp.sqrt(jnp.maximum(d_an2, 1e-12))
        # MarginRankingLoss(dist_an, dist_ap, y=1): max(0, dist_ap - dist_an + margin)
        out_ref[...] = jnp.maximum(dist_ap - dist_an + margin, 0.0)


def _default_row_tile(n):
    # v5e/v6e (1 TensorCore, 128 MiB VMEM, HBM-bound candidate restream): big row
    # tiles; v7x (2 TensorCores, 64 MiB VMEM): smaller tiles + >=2 row tiles so both
    # cores (row axis is the "parallel" axis) get work even for small batches.
    try:
        kind = jax.devices()[0].device_kind.lower()
    except Exception:  # pragma: no cover - e.g. interpret/CPU environments
        kind = ""
    single_core = any(s in kind for s in ("v5e", "v5 lite", "v6"))
    cap = 512 if single_core else 256
    if n > cap:
        return cap
    if single_core:
        return max(8, _round_up(n, 8))                 # one tile: no candidate restream
    return max(8, _round_up((n + 1) // 2, 8))          # >=2 tiles: feed both TCs


def _choose_tiles(n, d, row_tile, col_tile, d_tile):
    if row_tile is None:
        row_tile = _default_row_tile(n)
    row_tile = max(8, _round_up(row_tile, 8))
    if col_tile is None:
        col_tile = min(512, _round_up(max(n, 1), 128))
    col_tile = max(128, _round_up(col_tile, 128))
    # Contraction tiling only when D is large enough to pressure VMEM (v7x: 64 MiB).
    d128 = _round_up(max(d, 1), 128)
    if d_tile is None:
        d_blk = d128 if d128 <= 4096 else 2048
    else:
        d_blk = max(128, _round_up(min(d_tile, d128), 128))
    d_pad = _round_up(d128, d_blk)
    return row_tile, col_tile, d_blk, d_pad


def _default_vmem_limit(tr, tc, d_blk, gram_itemsize, multi_k):
    # Double-buffered MXU operand blocks + small per-tile operands + scratch, plus
    # ~25% headroom for compiler temporaries; clamped to sane bounds.
    operands = 2 * (tr + tc) * d_blk * gram_itemsize
    small = 2 * (2 * (tr + tc) * 4 + tr * 4)
    scratch = 2 * tr * 128 * 4 + (tr * tc * 4 if multi_k else 0)
    need = operands + small + scratch
    return int(min(max(need + need // 4 + (2 << 20), 32 << 20), 120 << 20))


def triplet_loss_pallas(inputs, targets, margin=1.2, *, row_tile=None, col_tile=None,
                        d_tile=None, gram_dtype=jnp.float32, candidate_buffers=None,
                        vmem_limit_bytes=None):
    """Batch-hard triplet loss. inputs: (N, D) float features; targets: (N,) int labels."""
    n, d = inputs.shape
    tr, tc, d_blk, d_pad = _choose_tiles(n, d, row_tile, col_tile, d_tile)
    n_rows = _round_up(n, tr)     # anchor-axis padding   (independent: no lcm blow-up)
    n_cols = _round_up(n, tc)     # candidate-axis padding
    n_feat = max(n_rows, n_cols)
    num_k = d_pad // d_blk
    multi_k = num_k > 1

    x = inputs.astype(jnp.float32)
    x_p = jnp.pad(x, ((0, n_feat - n), (0, d_pad - d)))
    x_in = x_p.astype(gram_dtype)          # single MXU operand, used for BOTH sides

    # f32 half-norms: e = <xi,xj> - 0.5|xi|^2 - 0.5|xj|^2. Candidate-side padding is
    # -BIG so padded columns never win the hardest-negative max (no iota mask needed).
    nh = -0.5 * jnp.sum(x_p * x_p, axis=1)
    nh_anchor = nh[:n_rows].reshape(n_rows, 1)
    nh_cand = jnp.where(jnp.arange(n_cols) < n, nh[:n_cols], -_BIG).reshape(1, n_cols)

    # Padded labels use int32 min so they can never equal a real label (positive mask).
    sentinel = jnp.iinfo(jnp.int32).min
    t = targets.astype(jnp.int32)
    t_anchor = jnp.pad(t, (0, n_rows - n), constant_values=sentinel).reshape(n_rows, 1)
    t_cand = jnp.pad(t, (0, n_cols - n), constant_values=sentinel).reshape(1, n_cols)

    cand_spec = pl.BlockSpec((tc, d_blk), lambda i, j, k: (j, k))
    if candidate_buffers is not None:      # optional deeper pipelining for small-D configs
        cand_spec = pl.BlockSpec((tc, d_blk), lambda i, j, k: (j, k),
                                 pipeline_mode=pl.Buffered(candidate_buffers))

    if vmem_limit_bytes is None:
        vmem_limit_bytes = _default_vmem_limit(tr, tc, d_blk,
                                               jnp.dtype(gram_dtype).itemsize, multi_k)

    scratch = [pltpu.VMEM((tr, 128), jnp.float32),        # running min e | same class
               pltpu.VMEM((tr, 128), jnp.float32)]        # running max e | diff class
    if multi_k:
        scratch.append(pltpu.VMEM((tr, tc), jnp.float32))  # gram accumulator over k

    kernel = functools.partial(_triplet_kernel, margin=float(margin), multi_k=multi_k)
    per_anchor = pl.pallas_call(
        kernel,
        out_shape=jax.ShapeDtypeStruct((n_rows, 1), jnp.float32),
        grid_spec=pltpu.PrefetchScalarGridSpec(
            num_scalar_prefetch=0,
            grid=(n_rows // tr, n_cols // tc, num_k),
            in_specs=[
                pl.BlockSpec((tr, d_blk), lambda i, j, k: (i, k)),   # anchor features
                cand_spec,                                           # candidate features
                pl.BlockSpec((tr, 1), lambda i, j, k: (i, 0)),       # -0.5|x_i|^2
                pl.BlockSpec((1, tc), lambda i, j, k: (0, j)),       # -0.5|x_j|^2 (-BIG pad)
                pl.BlockSpec((tr, 1), lambda i, j, k: (i, 0)),       # labels_i
                pl.BlockSpec((1, tc), lambda i, j, k: (0, j)),       # labels_j (sentinel pad)
            ],
            out_specs=pl.BlockSpec((tr, 1), lambda i, j, k: (i, 0)),
            scratch_shapes=scratch,
        ),
        compiler_params=pltpu.CompilerParams(
            dimension_semantics=("parallel", "arbitrary", "arbitrary"),
            vmem_limit_bytes=int(vmem_limit_bytes)),
    )(x_in, x_in, nh_anchor, nh_cand, t_anchor, t_cand)

    # Mean over the true batch size (padded anchor rows sliced off).
    # TODO(synk): mutual_flag=True (returning the full NxN dist matrix) is not produced
    # by the online-mining kernel; only the default loss path is implemented.
    return jnp.sum(per_anchor[:n, 0]) / n


def _triplet_loss_ref(inputs, targets, margin=1.2):
    """Pure-JAX reference mirroring the PyTorch forward (sanity check)."""
    x = inputs.astype(jnp.float32)
    sq = jnp.sum(x * x, axis=1, keepdims=True)
    gram = jnp.matmul(x, x.T, precision=lax.Precision.HIGHEST)
    dist = jnp.sqrt(jnp.clip(sq + sq.T - 2.0 * gram, 1e-12, None))
    same = targets[:, None] == targets[None, :]
    dist_ap = jnp.max(jnp.where(same, dist, -_BIG), axis=1)
    dist_an = jnp.min(jnp.where(same, _BIG, dist), axis=1)
    return jnp.mean(jnp.maximum(dist_ap - dist_an + margin, 0.0))


if __name__ == "__main__":
    key = jax.random.PRNGKey(0)
    k1, k2, k3 = jax.random.split(key, 3)

    # --- Test 1: small shape consistent with the module (single-tile path) ---
    n1, d1 = 8, 32
    x1 = jax.random.normal(k1, (n1, d1), dtype=jnp.float32)
    t1 = jnp.array([0, 0, 1, 1, 2, 2, 3, 3], dtype=jnp.int32)       # 4 ids x 2 samples
    loss1 = jax.block_until_ready(triplet_loss_pallas(x1, t1, margin=1.2))
    ref1 = _triplet_loss_ref(x1, t1, margin=1.2)
    assert jnp.allclose(loss1, ref1, rtol=1e-3, atol=1e-3), (loss1, ref1)

    # --- Test 2: multi-tile grid (independent row/col padding, online column mining) ---
    n2, d2 = 200, 72
    x2 = jax.random.normal(k2, (n2, d2), dtype=jnp.float32)
    t2 = (jnp.arange(n2) // 4).astype(jnp.int32)                    # 50 ids x 4 samples
    loss2 = jax.block_until_ready(
        triplet_loss_pallas(x2, t2, margin=1.2, row_tile=64, col_tile=128))
    ref2 = _triplet_loss_ref(x2, t2, margin=1.2)
    assert jnp.allclose(loss2, ref2, rtol=1e-3, atol=1e-3), (loss2, ref2)

    # --- Test 3: bf16 MXU feed (f32 norms + f32 accumulation), loose tolerance ---
    loss3 = jax.block_until_ready(
        triplet_loss_pallas(x2, t2, margin=1.2, row_tile=64, col_tile=128,
                            gram_dtype=jnp.bfloat16))
    assert bool(jnp.isfinite(loss3)) and abs(float(loss3) - float(ref2)) < 0.1, (loss3, ref2)

    # --- Test 4: D-tiled path (contraction grid axis + gram accumulator scratch) ---
    n4, d4 = 64, 200
    x4 = jax.random.normal(k3, (n4, d4), dtype=jnp.float32)
    t4 = (jnp.arange(n4) // 8).astype(jnp.int32)                    # 8 ids x 8 samples
    loss4 = jax.block_until_ready(
        triplet_loss_pallas(x4, t4, margin=1.2, row_tile=32, col_tile=128, d_tile=128))
    ref4 = _triplet_loss_ref(x4, t4, margin=1.2)
    assert jnp.allclose(loss4, ref4, rtol=1e-3, atol=1e-3), (loss4, ref4)

    print("KERNEL_OK")
</pallas_src>

<mosaic_0001>
module attributes {stable_mosaic.version = 11 : i64} {
  func.func @_triplet_kernel(%arg0: i32, %arg1: i32, %arg2: i32, %arg3: memref<8x128xf32, #tpu.memory_space<vmem>>, %arg4: memref<128x128xf32, #tpu.memory_space<vmem>>, %arg5: memref<8x1xf32, #tpu.memory_space<vmem>>, %arg6: memref<1x128xf32, #tpu.memory_space<vmem>>, %arg7: memref<8x1xi32, #tpu.memory_space<vmem>>, %arg8: memref<1x128xi32, #tpu.memory_space<vmem>>, %arg9: memref<8x1xf32, #tpu.memory_space<vmem>>, %arg10: memref<8x128xf32, #tpu.memory_space<vmem>>, %arg11: memref<8x128xf32, #tpu.memory_space<vmem>>) attributes {dimension_semantics = [#tpu.dimension_semantics<parallel>, #tpu.dimension_semantics<arbitrary>, #tpu.dimension_semantics<arbitrary>], iteration_bounds = array<i64: 1, 1, 1>, scalar_prefetch = 0 : i64, scratch_operands = 2 : i64, tpu.core_type = #tpu.core_type<tc>, window_params = [{transform_indices = @transform_0, window_bounds = array<i64: 8, 128>}, {transform_indices = @transform_1, window_bounds = array<i64: 128, 128>}, {transform_indices = @transform_2, window_bounds = array<i64: 8, 1>}, {transform_indices = @transform_3, window_bounds = array<i64: 1, 128>}, {transform_indices = @transform_4, window_bounds = array<i64: 8, 1>}, {transform_indices = @transform_5, window_bounds = array<i64: 1, 128>}, {transform_indices = @transform_6, window_bounds = array<i64: 8, 1>}]} {
    %c0_i32 = arith.constant 0 : i32
    %0 = arith.cmpi eq, %arg1, %c0_i32 : i32
    %c0_i32_0 = arith.constant 0 : i32
    %1 = arith.cmpi eq, %arg2, %c0_i32_0 : i32
    %2 = arith.andi %0, %1 : i1
    %3 = arith.extui %2 : i1 to i32
    %c0_i32_1 = arith.constant 0 : i32
    %4 = arith.cmpi ne, %3, %c0_i32_1 : i32
    scf.if %4 {
      %cst_10 = arith.constant 1.000000e+30 : f32
      %16 = vector.broadcast %cst_10 : f32 to vector<8x128xf32>
      %c0_11 = arith.constant 0 : index
      %c0_12 = arith.constant 0 : index
      %17 = vector.load %arg10[%c0_11, %c0_12] : memref<8x128xf32, #tpu.memory_space<vmem>>, vector<8x128xf32>
      tpu.vector_store %arg10[%c0_11, %c0_12], %16 {strides = array<i32>} : memref<8x128xf32, #tpu.memory_space<vmem>>, vector<8x128xf32>,
      %cst_13 = arith.constant -1.000000e+30 : f32
      %18 = vector.broadcast %cst_13 : f32 to vector<8x128xf32>
      %c0_14 = arith.constant 0 : index
      %c0_15 = arith.constant 0 : index
      %19 = vector.load %arg11[%c0_14, %c0_15] : memref<8x128xf32, #tpu.memory_space<vmem>>, vector<8x128xf32>
      tpu.vector_store %arg11[%c0_14, %c0_15], %18 {strides = array<i32>} : memref<8x128xf32, #tpu.memory_space<vmem>>, vector<8x128xf32>,
    } else {
    }
    %c0 = arith.constant 0 : index
    %c0_2 = arith.constant 0 : index
    %5 = vector.load %arg3[%c0, %c0_2] : memref<8x128xf32, #tpu.memory_space<vmem>>, vector<8x128xf32>
    %c0_3 = arith.constant 0 : index
    %c0_4 = arith.constant 0 : index
    %6 = vector.load %arg4[%c0_3, %c0_4] : memref<128x128xf32, #tpu.memory_space<vmem>>, vector<128x128xf32>
    %cst = arith.constant dense<0.000000e+00> : vector<8x128xf32>
    %7 = tpu.matmul %5, %6, %cst {dimension_numbers = #tpu.dot_dimension_numbers<[1], [1], [0], [0], [0, 0, 1, 0], [], []>} : vector<8x128xf32>, vector<128x128xf32>, vector<8x128xf32> -> vector<8x128xf32>
    %c0_i32_5 = arith.constant 0 : i32
    %8 = arith.cmpi eq, %arg2, %c0_i32_5 : i32
    %9 = arith.extui %8 : i1 to i32
    %c0_i32_6 = arith.constant 0 : i32
    %10 = arith.cmpi ne, %9, %c0_i32_6 : i32
    scf.if %10 {
      %c0_10 = arith.constant 0 : index
      %c0_11 = arith.constant 0 : index
      %16 = vector.load %arg5[%c0_10, %c0_11] : memref<8x1xf32, #tpu.memory_space<vmem>>, vector<8x1xf32>
      %17 = vector.broadcast %16 : vector<8x1xf32> to vector<8x128xf32>
      %18 = arith.addf %7, %17 : vector<8x128xf32>
      %c0_12 = arith.constant 0 : index
      %c0_13 = arith.constant 0 : index
      %19 = vector.load %arg6[%c0_12, %c0_13] : memref<1x128xf32, #tpu.memory_space<vmem>>, vector<1x128xf32>
      %20 = vector.broadcast %19 : vector<1x128xf32> to vector<8x128xf32>
      %21 = arith.addf %18, %20 : vector<8x128xf32>
      %c0_14 = arith.constant 0 : index
      %c0_15 = arith.constant 0 : index
      %22 = vector.load %arg7[%c0_14, %c0_15] : memref<8x1xi32, #tpu.memory_space<vmem>>, vector<8x1xi32>
      %c0_16 = arith.constant 0 : index
      %c0_17 = arith.constant 0 : index
      %23 = vector.load %arg8[%c0_16, %c0_17] : memref<1x128xi32, #tpu.memory_space<vmem>>, vector<1x128xi32>
      %24 = vector.broadcast %22 : vector<8x1xi32> to vector<8x128xi32>
      %25 = vector.broadcast %23 : vector<1x128xi32> to vector<8x128xi32>
      %26 = arith.cmpi eq, %24, %25 : vector<8x128xi32>
      %cst_18 = arith.constant 1.000000e+30 : f32
      %27 = vector.broadcast %cst_18 : f32 to vector<8x128xf32>
      %28 = arith.select %26, %21, %27 : vector<8x128xi1>, vector<8x128xf32>
      %cst_19 = arith.constant -1.000000e+30 : f32
      %29 = vector.broadcast %cst_19 : f32 to vector<8x128xf32>
      %30 = arith.select %26, %29, %21 : vector<8x128xi1>, vector<8x128xf32>
      %c0_20 = arith.constant 0 : index
      %c0_21 = arith.constant 0 : index
      %31 = vector.load %arg10[%c0_20, %c0_21] : memref<8x128xf32, #tpu.memory_space<vmem>>, vector<8x128xf32>
      %c0_22 = arith.constant 0 : index
      %c0_23 = arith.constant 0 : index
      %32 = vector.load %arg11[%c0_22, %c0_23] : memref<8x128xf32, #tpu.memory_space<vmem>>, vector<8x128xf32>
      %33 = arith.minimumf %31, %28 : vector<8x128xf32>
      %34 = arith.maximumf %32, %30 : vector<8x128xf32>
      %c0_24 = arith.constant 0 : index
      %c0_25 = arith.constant 0 : index
      %35 = vector.load %arg10[%c0_24, %c0_25] : memref<8x128xf32, #tpu.memory_space<vmem>>, vector<8x128xf32>
      tpu.vector_store %arg10[%c0_24, %c0_25], %33 {strides = array<i32>} : memref<8x128xf32, #tpu.memory_space<vmem>>, vector<8x128xf32>,
      %c0_26 = arith.constant 0 : index
      %c0_27 = arith.constant 0 : index
      %36 = vector.load %arg11[%c0_26, %c0_27] : memref<8x128xf32, #tpu.memory_space<vmem>>, vector<8x128xf32>
      tpu.vector_store %arg11[%c0_26, %c0_27], %34 {strides = array<i32>} : memref<8x128xf32, #tpu.memory_space<vmem>>, vector<8x128xf32>,
    } else {
    }
    %c0_i32_7 = arith.constant 0 : i32
    %11 = arith.cmpi eq, %arg1, %c0_i32_7 : i32
    %c0_i32_8 = arith.constant 0 : i32
    %12 = arith.cmpi eq, %arg2, %c0_i32_8 : i32
    %13 = arith.andi %11, %12 : i1
    %14 = arith.extui %13 : i1 to i32
    %c0_i32_9 = arith.constant 0 : i32
    %15 = arith.cmpi ne, %14, %c0_i32_9 : i32
    scf.if %15 {
      %c0_10 = arith.constant 0 : index
      %c0_11 = arith.constant 0 : index
      %16 = vector.load %arg10[%c0_10, %c0_11] : memref<8x128xf32, #tpu.memory_space<vmem>>, vector<8x128xf32>
      %cst_12 = arith.constant dense<0x7F800000> : vector<8xf32>
      %17 = vector.multi_reduction <minimumf>, %16, %cst_12 [1] : vector<8x128xf32> to vector<8xf32>
      %18 = vector.shape_cast %17 : vector<8xf32> to vector<8x1xf32>
      %cst_13 = arith.constant -2.000000e+00 : f32
      %19 = vector.broadcast %cst_13 : f32 to vector<8x1xf32>
      %20 = arith.mulf %19, %18 : vector<8x1xf32>
      %c0_14 = arith.constant 0 : index
      %c0_15 = arith.constant 0 : index
      %21 = vector.load %arg11[%c0_14, %c0_15] : memref<8x128xf32, #tpu.memory_space<vmem>>, vector<8x128xf32>
      %cst_16 = arith.constant dense<0xFF800000> : vector<8xf32>
      %22 = vector.multi_reduction <maximumf>, %21, %cst_16 [1] : vector<8x128xf32> to vector<8xf32>
      %23 = vector.shape_cast %22 : vector<8xf32> to vector<8x1xf32>
      %cst_17 = arith.constant -2.000000e+00 : f32
      %24 = vector.broadcast %cst_17 : f32 to vector<8x1xf32>
      %25 = arith.mulf %24, %23 : vector<8x1xf32>
      %cst_18 = arith.constant 9.99999996E-13 : f32
      %26 = vector.broadcast %cst_18 : f32 to vector<8x1xf32>
      %27 = arith.maximumf %20, %26 : vector<8x1xf32>
      %28 = math.sqrt %27 : vector<8x1xf32>
      %cst_19 = arith.constant 9.99999996E-13 : f32
      %29 = vector.broadcast %cst_19 : f32 to vector<8x1xf32>
      %30 = arith.maximumf %25, %29 : vector<8x1xf32>
      %31 = math.sqrt %30 : vector<8x1xf32>
      %32 = arith.subf %28, %31 : vector<8x1xf32>
      %cst_20 = arith.constant 1.200000e+00 : f32
      %33 = vector.broadcast %cst_20 : f32 to vector<8x1xf32>
      %34 = arith.addf %32, %33 : vector<8x1xf32>
      %cst_21 = arith.constant 0.000000e+00 : f32
      %35 = vector.broadcast %cst_21 : f32 to vector<8x1xf32>
      %36 = arith.maximumf %34, %35 : vector<8x1xf32>
      %c0_22 = arith.constant 0 : index
      %c0_23 = arith.constant 0 : index
      %37 = vector.load %arg9[%c0_22, %c0_23] : memref<8x1xf32, #tpu.memory_space<vmem>>, vector<8x1xf32>
      tpu.vector_store %arg9[%c0_22, %c0_23], %36 {strides = array<i32>} : memref<8x1xf32, #tpu.memory_space<vmem>>, vector<8x1xf32>,
    } else {
    }
    return
  }
  func.func @transform_0(%arg0: i32, %arg1: i32, %arg2: i32) -> (i32, i32) {
    %c0_i32 = arith.constant 0 : i32
    return %arg0, %arg2 : i32, i32
  }
  func.func @transform_1(%arg0: i32, %arg1: i32, %arg2: i32) -> (i32, i32) {
    %c0_i32 = arith.constant 0 : i32
    return %arg1, %arg2 : i32, i32
  }
  func.func @transform_2(%arg0: i32, %arg1: i32, %arg2: i32) -> (i32, i32) {
    %c0_i32 = arith.constant 0 : i32
    %c0_i32_0 = arith.constant 0 : i32
    return %arg0, %c0_i32 : i32, i32
  }
  func.func @transform_3(%arg0: i32, %arg1: i32, %arg2: i32) -> (i32, i32) {
    %c0_i32 = arith.constant 0 : i32
    %c0_i32_0 = arith.constant 0 : i32
    return %c0_i32, %arg1 : i32, i32
  }
  func.func @transform_4(%arg0: i32, %arg1: i32, %arg2: i32) -> (i32, i32) {
    %c0_i32 = arith.constant 0 : i32
    %c0_i32_0 = arith.constant 0 : i32
    return %arg0, %c0_i32 : i32, i32
  }
  func.func @transform_5(%arg0: i32, %arg1: i32, %arg2: i32) -> (i32, i32) {
    %c0_i32 = arith.constant 0 : i32
    %c0_i32_0 = arith.constant 0 : i32
    return %c0_i32, %arg1 : i32, i32
  }
  func.func @transform_6(%arg0: i32, %arg1: i32, %arg2: i32) -> (i32, i32) {
    %c0_i32 = arith.constant 0 : i32
    %c0_i32_0 = arith.constant 0 : i32
    return %arg0, %c0_i32 : i32, i32
  }
}

</mosaic_0001>

<llo_original>
// kernel: tpu_custom_call.1
$region0: #{tpu_custom_call.1}
  #allocation0 [shape = 'u32[]', space=smem, size = 0x4, offset = 0x4, fixed_abs, tag = 'smem constant byte address 0x4 - core index']
  #allocation1 [shape = 'u32[144,128]{1,0:T(1,128)}', space=vmem, size = 0x12000, scoped, tag = 'internal scratch']
  #allocation2 [shape = 'f32[8,128]{1,0:T(8,128)}', space=vmem, size = 0x1000, scoped, tag = 'scratch operand']
  #allocation3 [shape = 'f32[8,128]{1,0:T(8,128)}', space=vmem, size = 0x1000, scoped, tag = 'scratch operand']
  %s0 = inlined_call_operand.hbm [shape: f32[128,128], index: 0, kind: input, shape index: {}]
  %s1 = inlined_call_operand.hbm [shape: f32[128,128], index: 1, kind: input, shape index: {}]
  %s2 = inlined_call_operand.vmem [shape: f32[8,1], index: 2, kind: input, shape index: {}]
  %s3 = inlined_call_operand.vmem [shape: f32[1,128], index: 3, kind: input, shape index: {}]
  %s4 = inlined_call_operand.vmem [shape: s32[8,1], index: 4, kind: input, shape index: {}]
  %s5 = inlined_call_operand.vmem [shape: s32[1,128], index: 5, kind: input, shape index: {}]
  %s6 = inlined_call_operand.vmem [shape: f32[8,1], index: 6, kind: output, shape index: {}]
  %s7 = sld [smem:[#allocation0]]
  $region54: #{tpu_custom_call.1} parent=0
    _
  %s9 = ssub.s32 1, %s7
  %s10 = scalar_select 0, %s9, %s7
  $region1: #{tpu_custom_call.1} parent=0
    #allocation4 [shape = 'u8[4096]{0}', space=vmem, size = 0x1000, scoped, tag = 'input window, operand 0, single buffered']
    #allocation5 [shape = 's32[1]{0}', space=sflag, size = 0x4, scoped, tag = 'scoped memory for tpu_custom_call.1']
    #allocation6 [shape = 'u8[65536]{0}', space=vmem, size = 0x10000, scoped, tag = 'input window, operand 1, single buffered']
    #allocation7 [shape = 's32[1]{0}', space=sflag, size = 0x4, scoped, tag = 'scoped memory for tpu_custom_call.1']
    %11 = vsyncpa [#allocation5], 0
    %12 = vsyncpa [#allocation7], 0
    // Predicated region
    $region2: #{tpu_custom_call.1} parent=1 // pred_check
      _
    $region3: #{tpu_custom_call.1} parent=1 // pred_check_branch
      %14 = sbr.rel (0) target = $region5
    $region4: #{tpu_custom_call.1} parent=1 // pred_region
      %s16 = ssub.s32 128, 128
      %17 = vsyncadd [#allocation5], %s16
      %s19 = sshll.u32 [#allocation4], 4
      %s20 = int_to_ptr.vmem [resolvable:$true] %s19
      %22 = dma.hbm_to_vmem [thread:$0]  %s0, 128, %s20, [#allocation5]
    $region5: #{tpu_custom_call.1} parent=1 // pred_fallthru
      _
    // Predicated region
    $region6: #{tpu_custom_call.1} parent=1 // pred_check
      _
    $region7: #{tpu_custom_call.1} parent=1 // pred_check_branch
      %24 = sbr.rel (0) target = $region9
    $region8: #{tpu_custom_call.1} parent=1 // pred_region
      %s26 = ssub.s32 2048, 2048
      %27 = vsyncadd [#allocation7], %s26
      %s28 = sshll.u32 [#allocation6], 4
      %s29 = int_to_ptr.vmem [resolvable:$true] %s28
      %34 = dma.hbm_to_vmem [thread:$0]  %s1, 2048, %s29, [#allocation7], 128, 128, 8
    $region9: #{tpu_custom_call.1} parent=1 // pred_fallthru
      _
    // Predicated region
    $region10: #{tpu_custom_call.1} parent=1 // pred_check
      _
    $region11: #{tpu_custom_call.1} parent=1 // pred_check_branch
      %36 = sbr.rel (0) target = $region13
    $region12: #{tpu_custom_call.1} parent=1 // pred_region
      _
    $region13: #{tpu_custom_call.1} parent=1 // pred_fallthru
      _
    // Predicated region
    $region14: #{tpu_custom_call.1} parent=1 // pred_check
      _
    $region15: #{tpu_custom_call.1} parent=1 // pred_check_branch
      %38 = sbr.rel (0) target = $region17
    $region16: #{tpu_custom_call.1} parent=1 // pred_region
      _
    $region17: #{tpu_custom_call.1} parent=1 // pred_fallthru
      _
    // Predicated region
    $region18: #{tpu_custom_call.1} parent=1 // pred_check
      _
    $region19: #{tpu_custom_call.1} parent=1 // pred_check_branch
      %40 = sbr.rel (0) target = $region21
    $region20: #{tpu_custom_call.1} parent=1 // pred_region
      _
    $region21: #{tpu_custom_call.1} parent=1 // pred_fallthru
      _
    // Predicated region
    $region22: #{tpu_custom_call.1} parent=1 // pred_check
      _
    $region23: #{tpu_custom_call.1} parent=1 // pred_check_branch
      %42 = sbr.rel (0) target = $region25
    $region24: #{tpu_custom_call.1} parent=1 // pred_region
      _
    $region25: #{tpu_custom_call.1} parent=1 // pred_fallthru
      _
    // Predicated region
    $region26: #{tpu_custom_call.1} parent=1 // pred_check
      _
    $region27: #{tpu_custom_call.1} parent=1 // pred_check_branch
      %44 = sbr.rel (0) target = $region29
    $region28: #{tpu_custom_call.1} parent=1 // pred_region
      %45 = dma.done [#allocation5], 128
    $region29: #{tpu_custom_call.1} parent=1 // pred_fallthru
      _
    // Predicated region
    $region30: #{tpu_custom_call.1} parent=1 // pred_check
      _
    $region31: #{tpu_custom_call.1} parent=1 // pred_check_branch
      %47 = sbr.rel (0) target = $region33
    $region32: #{tpu_custom_call.1} parent=1 // pred_region
      %48 = dma.done [#allocation7], 2048
    $region33: #{tpu_custom_call.1} parent=1 // pred_fallthru
      _
    %p49 = scmp.eq.s32.totalorder 0, 0
    %p50 = scmp.eq.s32.totalorder 0, 0
    %p51 = pnand %p49, %p50
    %p52 = pneg %p51
    // Predicated region
    $region34: #{tpu_custom_call.1} parent=1 // pred_check
      _
    $region35: #{tpu_custom_call.1} parent=1 // pred_check_branch
      %54 = sbr.rel (%p51) target = $region37
    $region36: #{tpu_custom_call.1} parent=1 // pred_region
      %55 = vst [vmem:[#allocation2] sm:$0xff] 1e+30
      %56 = vst [vmem:[#allocation3] sm:$0xff] -1e+30
    $region37: #{tpu_custom_call.1} parent=1 // pred_fallthru
      _
    %v57 = vld [vmem:[#allocation4] sm:$0xff]
    %v58 = vld [vmem:[#allocation6] sm:$0xff]
    %v59 = vld [vmem:[#allocation6 + $0x8] sm:$0xff]
    %v60 = vld [vmem:[#allocation6 + $0x10] sm:$0xff]
    %v61 = vld [vmem:[#allocation6 + $0x18] sm:$0xff]
    %v62 = vld [vmem:[#allocation6 + $0x20] sm:$0xff]
    %v63 = vld [vmem:[#allocation6 + $0x28] sm:$0xff]
    %v64 = vld [vmem:[#allocation6 + $0x30] sm:$0xff]
    %v65 = vld [vmem:[#allocation6 + $0x38] sm:$0xff]
    %v66 = vld [vmem:[#allocation6 + $0x40] sm:$0xff]
    %v67 = vld [vmem:[#allocation6 + $0x48] sm:$0xff]
    %v68 = vld [vmem:[#allocation6 + $0x50] sm:$0xff]
    %v69 = vld [vmem:[#allocation6 + $0x58] sm:$0xff]
    %v70 = vld [vmem:[#allocation6 + $0x60] sm:$0xff]
    %v71 = vld [vmem:[#allocation6 + $0x68] sm:$0xff]
    %v72 = vld [vmem:[#allocation6 + $0x70] sm:$0xff]
    %v73 = vld [vmem:[#allocation6 + $0x78] sm:$0xff]
    // Predicated region
    $region38: #{tpu_custom_call.1} parent=1 // pred_check
      %p74 = pneg %p50
    $region39: #{tpu_custom_call.1} parent=1 // pred_check_branch
      %76 = sbr.rel (%p74) target = $region41
    $region40: #{tpu_custom_call.1} parent=1 // pred_region
      %v77 = vld [vmem:[%s2] sm:$0xff]
      %79 = vset.pattern.permute.xlu0 0
      %80 = vperm.xlu0 %79, %v77
      %v81 = vpop.permute.xlu0 %80
      %83 = vmatprep.subr.mxu0 0.0
      %84 = vmatpush1.xpose.msra.mxu0 %v58
      %85 = vmatprep.subr.mxu0 0.0
      %86 = vmatpush1.xpose.msra.mxu0 %v59
      %87 = vmatprep.subr.mxu0 0.0
      %88 = vmatpush1.xpose.msra.mxu0 %v60
      %89 = vmatprep.subr.mxu0 0.0
      %90 = vmatpush1.xpose.msra.mxu0 %v61
      %91 = vmatprep.subr.mxu0 0.0
      %92 = vmatpush1.xpose.msra.mxu0 %v62
      %93 = vmatprep.subr.mxu0 0.0
      %94 = vmatpush1.xpose.msra.mxu0 %v63
      %95 = vmatprep.subr.mxu0 0.0
      %96 = vmatpush1.xpose.msra.mxu0 %v64
      %97 = vmatprep.subr.mxu0 0.0
      %98 = vmatpush1.xpose.msra.mxu0 %v65
      %99 = vmatprep.subr.mxu0 0.0
      %100 = vmatpush1.xpose.msra.mxu0 %v66
      %101 = vmatprep.subr.mxu0 0.0
      %102 = vmatpush1.xpose.msra.mxu0 %v67
      %103 = vmatprep.subr.mxu0 0.0
      %104 = vmatpush1.xpose.msra.mxu0 %v68
      %105 = vmatprep.subr.mxu0 0.0
      %106 = vmatpush1.xpose.msra.mxu0 %v69
      %107 = vmatprep.subr.mxu0 0.0
      %108 = vmatpush1.xpose.msra.mxu0 %v70
      %109 = vmatprep.subr.mxu0 0.0
      %110 = vmatpush1.xpose.msra.mxu0 %v71
      %111 = vmatprep.subr.mxu0 0.0
      %112 = vmatpush1.xpose.msra.mxu0 %v72
      %113 = vmatprep.subr.mxu0 0.0
      %114 = vmatpush1.xpose.msra.mxu0 %v73
      %115 = vmatprep.subr.mxu0 0.0
      %116 = vmatpush1.xpose.msra.mxu0 0.0
      %117 = vmatprep.subr.mxu0 0.0
      %118 = vmatpush1.xpose.msra.mxu0 0.0
      %119 = vmatprep.subr.mxu0 0.0
      %120 = vmatpush1.xpose.msra.mxu0 0.0
      %121 = vmatprep.subr.mxu0 0.0
      %122 = vmatpush1.xpose.msra.mxu0 0.0
      %123 = vmatprep.subr.mxu0 0.0
      %124 = vmatpush1.xpose.msra.mxu0 0.0
      %125 = vmatprep.subr.mxu0 0.0
      %126 = vmatpush1.xpose.msra.mxu0 0.0
      %127 = vmatprep.subr.mxu0 0.0
      %128 = vmatpush1.xpose.msra.mxu0 0.0
      %129 = vmatprep.subr.mxu0 0.0
      %130 = vmatpush1.xpose.msra.mxu0 0.0
      %131 = vmatprep.subr.mxu0 0.0
      %132 = vmatpush1.xpose.msra.mxu0 0.0
      %133 = vmatprep.subr.mxu0 0.0
      %134 = vmatpush1.xpose.msra.mxu0 0.0
      %135 = vmatprep.subr.mxu0 0.0
      %136 = vmatpush1.xpose.msra.mxu0 0.0
      %137 = vmatprep.subr.mxu0 0.0
      %138 = vmatpush1.xpose.msra.mxu0 0.0
      %139 = vmatprep.subr.mxu0 0.0
      %140 = vmatpush1.xpose.msra.mxu0 0.0
      %141 = vmatprep.subr.mxu0 0.0
      %142 = vmatpush1.xpose.msra.mxu0 0.0
      %143 = vmatprep.subr.mxu0 0.0
      %144 = vmatpush1.xpose.msra.mxu0 0.0
      %145 = vmatprep.subr.mxu0 0.0
      %146 = vmatpush1.xpose.msra.mxu0 0.0
      %147 = vmatprep.mubr.f32.mxu0 0.0
      %148 = vmatmul.mubr.f32.gmra.mrb[0].mxu0 %v57
      %v149 = vpop.f32.mrb[0].mxu0
      %v150 = vadd.f32 %v81, %v149
      %v151 = vpop.f32.mrb[0].mxu0
      %152 = vdwg.mxu0
      %v153 = vld [vmem:[%s3] sm:$0x1]
      %v155 = vlaneseq
      %v156 = vshrl.u32 %v155, 7
      %v157 = vsub.s32 0, %v156
      %v158 = vrot.slane %v153, %v157
      %v160 = vadd.f32 %v150, %v158
      %v161 = vld [vmem:[%s4] sm:$0xff]
      %v162 = vld [vmem:[%s5] sm:$0x1]
      %163 = vset.pattern.permute.xlu0 0
      %164 = vperm.xlu0 %163, %v161
      %v165 = vpop.permute.xlu0 %164
      %v166 = vlaneseq
      %v167 = vshrl.u32 %v166, 7
      %v168 = vsub.s32 0, %v167
      %v169 = vrot.slane %v162, %v168
      %vm170 = vcmp.eq.s32.totalorder %v165, %v169
      %v171 = vsel %vm170, %v160, 1e+30
      %v172 = vsel %vm170, -1e+30, %v160
      %v173 = vld [vmem:[#allocation2] sm:$0xff]
      %v174 = vld [vmem:[#allocation3] sm:$0xff]
      %v175 = vmin.f32 %v173, %v171
      %v176 = vmax.f32 %v174, %v172
      %177 = vst [vmem:[#allocation2] sm:$0xff] %v175
      %178 = vst [vmem:[#allocation3] sm:$0xff] %v176
    $region41: #{tpu_custom_call.1} parent=1 // pred_fallthru
      _
    // Predicated region
    $region42: #{tpu_custom_call.1} parent=1 // pred_check
      _
    $region43: #{tpu_custom_call.1} parent=1 // pred_check_branch
      %180 = sbr.rel (%p51) target = $region45
    $region44: #{tpu_custom_call.1} parent=1 // pred_region
      %v181 = vld [vmem:[#allocation2] sm:$0xff]
      %182 = vmin.xlane.f32.xlu0 %v181
      %v183 = vpop.xlane.xlu0 %182
      %v184 = vmul.f32 %v183, -2.0
      %v185 = vld [vmem:[#allocation3] sm:$0xff]
      %186 = vmax.xlane.f32.xlu0 %v185
      %v187 = vpop.xlane.xlu0 %186
      %v188 = vmul.f32 %v187, -2.0
      %v189 = vmax.f32 %v184, 1e-12
      %v190 = vrsqrt.pop %v189
      %v191 = vmul.f32 %v189, %v190
      %vm192 = vcmp.eq.f32.partialorder %v189, inf
      %v193 = vsel %vm192, %v189, %v191
      %vm194 = vcmp.eq.f32.partialorder %v189, 0.0
      %v195 = vand.u32 %v189, 2147483648
      %v196 = vsel %vm194, %v195, %v193
      %v197 = vmax.f32 %v188, 1e-12
      %v198 = vrsqrt.pop %v197
      %v199 = vmul.f32 %v197, %v198
      %vm200 = vcmp.eq.f32.partialorder %v197, inf
      %v201 = vsel %vm200, %v197, %v199
      %vm202 = vcmp.eq.f32.partialorder %v197, 0.0
      %v203 = vand.u32 %v197, 2147483648
      %v204 = vsel %vm202, %v203, %v201
      %v205 = vsub.f32 %v196, %v204
      %v206 = vadd.f32 %v205, 1.2
      %v207 = vmax.f32 %v206, 0.0
      %vm208 = vcmask 7168
      %209 = vst.msk [vmem:[%s6] sm:$0xff] %vm208, %v207
    $region45: #{tpu_custom_call.1} parent=1 // pred_fallthru
      _
    // Predicated region
    $region46: #{tpu_custom_call.1} parent=1 // pred_check
      _
    $region47: #{tpu_custom_call.1} parent=1 // pred_check_branch
      %211 = sbr.rel (0) target = $region49
    $region48: #{tpu_custom_call.1} parent=1 // pred_region
      _
    $region49: #{tpu_custom_call.1} parent=1 // pred_fallthru
      _
    // Predicated region
    $region50: #{tpu_custom_call.1} parent=1 // pred_check
      _
    $region51: #{tpu_custom_call.1} parent=1 // pred_check_branch
      %213 = sbr.rel (0) target = $region53
    $region52: #{tpu_custom_call.1} parent=1 // pred_region
      _
    $region53: #{tpu_custom_call.1} parent=1 // pred_fallthru
      _
    %214 = vsyncpa [#allocation5], 1
    %215 = vsyncpa [#allocation7], 1

</llo_original>
